<compile_context>
chip_gen: v7x
topology: tpu7x:2x2x1
jax: 0.10.0
libtpu: 0.0.40
codegen_flags: <defaults>
</compile_context>

<pallas_src>
import jax
import jax.numpy as jnp
from jax.experimental import pallas as pl
from jax.experimental.pallas import tpu as pltpu

_SMALL_BYTES = 512 * 1024  # below this, a single block (pipelining can't help)


def telu_ref(x):
    xf = x.astype(jnp.float32)
    return (xf * jnp.tanh(jnp.exp(xf))).astype(x.dtype)


def _make_telu_kernel(compute_dtype):
    def _telu_kernel(x_ref, o_ref):
        x = x_ref[...].astype(compute_dtype)
        # exp overflow to +inf is benign: tanh(inf) = 1.
        o_ref[...] = (x * jnp.tanh(jnp.exp(x))).astype(o_ref.dtype)
    return _telu_kernel


def _sublane_multiple(dtype):
    itemsize = jnp.dtype(dtype).itemsize
    return {4: 8, 2: 16, 1: 32}.get(itemsize, 8)


def _chip_generation():
    try:
        kind = jax.devices()[0].device_kind.lower()
    except Exception:
        return 0
    for gen in (7, 6, 5, 4, 3, 2):
        if f"v{gen}" in kind:
            return gen
    return 0


def _default_block_bytes():
    """Generation-aware knee point: HBM BW vs ~0.35 us per-grid-step overhead."""
    gen = _chip_generation()
    if gen >= 7:      # ~3.2 TB/s HBM per TC, 64 MiB VMEM -> bigger blocks pay off
        return 8 << 20
    if gen == 6:      # ~1.4 TB/s HBM, 128 MiB VMEM
        return 4 << 20
    return 2 << 20    # v5e / older / unknown: already <10% overhead at 2 MiB


def _compute_dtype(dtype):
    """bf16 transcendentals on v6e/v7x (bf16 EUP); f32 elsewhere / for f32 I/O."""
    if jnp.dtype(dtype) == jnp.dtype(jnp.bfloat16) and _chip_generation() >= 6:
        return jnp.bfloat16
    return jnp.float32


def _pick_block_rows(rows, sub, max_block_rows, total_bytes):
    """Choose (block_rows, grid_len).

    block_rows is a multiple of `sub` (or == rows for tiny inputs), capped so
    the grid has enough steps to pipeline and feed both v7x TensorCores (even
    grid preferred). A ragged last block is allowed (Pallas masks OOB stores),
    so rows need not be divisible by block_rows.
    """
    if total_bytes <= _SMALL_BYTES or rows < 2 * sub:
        return rows, 1  # single full-array block; no (8,128) constraint applies

    # At least 2 steps; aim for ~8 on big inputs, but never shrink blocks below
    # ~256 KiB just to manufacture steps.
    min_steps = int(min(8, max(2, total_bytes // (256 * 1024))))
    cap = min(max_block_rows, (rows // min_steps) // sub * sub)
    cap = max(cap, sub)

    # Prefer an exact divisor (no ragged tail) as long as it doesn't shrink the
    # block below ~half the cap; prefer an even grid (v7x megacore split).
    best_any = None
    best_even = None
    br = cap
    while br >= sub and 2 * br >= cap:
        if rows % br == 0:
            g = rows // br
            if best_any is None:
                best_any = (br, g)
            if g % 2 == 0:
                best_even = (br, g)
                break
        br -= sub
    if best_even is not None:
        return best_even
    if best_any is not None:
        return best_any
    # No suitable divisor: ragged last block (out-of-bounds stores are masked).
    return cap, int(pl.cdiv(rows, cap))


def _choose_layout(n, dtype, target_block_bytes):
    """Factor n into a pad-free, lane-dense (rows, cols) slab plus a row tiling.

    Returns (rows, cols, block_rows, grid_len) or None if no cols % 128 == 0
    factorization exists (caller falls back to fused XLA).
    """
    itemsize = jnp.dtype(dtype).itemsize
    sub = _sublane_multiple(dtype)
    total_bytes = n * itemsize
    for cols in (1024, 2048, 512, 256, 128):
        if n % cols:
            continue
        rows = n // cols
        max_block_rows = max(sub, (target_block_bytes // (cols * itemsize)) // sub * sub)
        block_rows, grid_len = _pick_block_rows(rows, sub, max_block_rows, total_bytes)
        return rows, cols, block_rows, grid_len
    return None


def telu(x, *, target_block_bytes=None, donate=False):
    """Elementwise TeLU via a tiled Pallas TPU kernel (any input shape)."""
    orig_shape = x.shape
    dtype = x.dtype
    n = int(x.size)
    if n == 0:
        return x

    if target_block_bytes is None:
        target_block_bytes = _default_block_bytes()

    layout = _choose_layout(n, dtype, target_block_bytes)
    if layout is None:
        # No lane-dense factorization: plain XLA fuses exp/tanh/mul into one
        # HBM pass (already at roofline); padding here would ~3x the traffic.
        return telu_ref(x)

    rows, cols, block_rows, grid_len = layout
    slab = x.reshape(rows, cols)  # pure reshape: no pad, no copy
    itemsize = jnp.dtype(dtype).itemsize
    block_bytes = block_rows * cols * itemsize

    # Scoped VMEM for 2x(in+out) block buffers plus headroom; capped well below
    # physical VMEM. (v5e's 16 MiB default would otherwise OOM 4-8 MiB blocks.)
    need = max(16 << 20, 4 * block_bytes + (8 << 20))
    try:
        phys = pltpu.get_tpu_info().vmem_capacity_bytes
    except Exception:
        phys = 64 << 20
    vmem_limit = int(min(need, int(phys * 0.75)))

    kernel = _make_telu_kernel(_compute_dtype(dtype))

    out = pl.pallas_call(
        kernel,
        out_shape=jax.ShapeDtypeStruct((rows, cols), dtype),
        grid_spec=pltpu.PrefetchScalarGridSpec(
            num_scalar_prefetch=0,
            grid=(grid_len,),
            in_specs=[pl.BlockSpec((block_rows, cols), lambda i: (i, 0))],
            out_specs=pl.BlockSpec((block_rows, cols), lambda i: (i, 0)),
        ),
        compiler_params=pltpu.CompilerParams(
            dimension_semantics=("parallel",),
            vmem_limit_bytes=vmem_limit,
        ),
        cost_estimate=pl.CostEstimate(
            flops=n,                       # one multiply per element
            transcendentals=2 * n,         # exp + tanh per element
            bytes_accessed=2 * n * itemsize,
        ),
        input_output_aliases={0: 0} if donate else {},
    )(slab)

    return out.reshape(orig_shape)


if __name__ == "__main__":
    key = jax.random.PRNGKey(0)
    k1, k2, k3, k4, k5 = jax.random.split(key, 5)

    # Small NCHW-like activation, consistent with the module's forward.
    x = jax.random.normal(k1, (2, 4, 16, 16), dtype=jnp.float32)
    y = jax.block_until_ready(telu(x))
    assert y.shape == x.shape and y.dtype == x.dtype
    assert jnp.allclose(y, telu_ref(x), atol=1e-5, rtol=1e-5)

    # Larger aligned shape: exercises the multi-step pipelined (even) grid.
    x_big = jax.random.normal(k2, (4, 128, 512), dtype=jnp.float32)
    y_big = jax.block_until_ready(telu(x_big))
    assert jnp.allclose(y_big, telu_ref(x_big), atol=1e-5, rtol=1e-5)

    # Shape whose row count has no convenient divisor: ragged-last-block path.
    x_rag = jax.random.normal(k3, (136, 32, 32), dtype=jnp.float32)
    y_rag = jax.block_until_ready(telu(x_rag))
    assert jnp.allclose(y_rag, telu_ref(x_rag), atol=1e-5, rtol=1e-5)

    # bf16 path (bf16 EUP compute on v6e/v7x, f32 compute elsewhere).
    x_bf16 = jax.random.normal(k4, (2, 8, 16, 32), dtype=jnp.bfloat16)
    y_bf16 = jax.block_until_ready(telu(x_bf16))
    assert jnp.allclose(y_bf16.astype(jnp.float32),
                        telu_ref(x_bf16).astype(jnp.float32),
                        atol=5e-2, rtol=5e-2)

    # Non-factorable shape: falls back to fused XLA (no pad round trip).
    x_odd = jax.random.normal(k5, (3, 5, 7), dtype=jnp.float32)
    y_odd = jax.block_until_ready(telu(x_odd))
    assert jnp.allclose(y_odd, telu_ref(x_odd), atol=1e-5, rtol=1e-5)

    print("KERNEL_OK")
</pallas_src>

<mosaic_0001>
module attributes {stable_mosaic.version = 11 : i64} {
  func.func @_telu_kernel(%arg0: i32, %arg1: memref<2x1024xf32, #tpu.memory_space<vmem>>, %arg2: memref<2x1024xf32, #tpu.memory_space<vmem>>) attributes {dimension_semantics = [#tpu.dimension_semantics<parallel>], iteration_bounds = array<i64: 1>, scalar_prefetch = 0 : i64, scratch_operands = 0 : i64, tpu.core_type = #tpu.core_type<tc>, window_params = [{transform_indices = @transform_0, window_bounds = array<i64: 2, 1024>}, {transform_indices = @transform_1, window_bounds = array<i64: 2, 1024>}]} {
    %c0 = arith.constant 0 : index
    %c0_0 = arith.constant 0 : index
    %0 = vector.load %arg1[%c0, %c0_0] : memref<2x1024xf32, #tpu.memory_space<vmem>>, vector<2x1024xf32>
    %1 = math.exp %0 : vector<2x1024xf32>
    %2 = math.tanh %1 : vector<2x1024xf32>
    %3 = arith.mulf %0, %2 : vector<2x1024xf32>
    %c0_1 = arith.constant 0 : index
    %c0_2 = arith.constant 0 : index
    %4 = vector.load %arg2[%c0_1, %c0_2] : memref<2x1024xf32, #tpu.memory_space<vmem>>, vector<2x1024xf32>
    tpu.vector_store %arg2[%c0_1, %c0_2], %3 {strides = array<i32>} : memref<2x1024xf32, #tpu.memory_space<vmem>>, vector<2x1024xf32>,
    return
  }
  func.func @transform_0(%arg0: i32) -> (i32, i32) {
    %c0_i32 = arith.constant 0 : i32
    %c0_i32_0 = arith.constant 0 : i32
    return %arg0, %c0_i32 : i32, i32
  }
  func.func @transform_1(%arg0: i32) -> (i32, i32) {
    %c0_i32 = arith.constant 0 : i32
    %c0_i32_0 = arith.constant 0 : i32
    return %arg0, %c0_i32 : i32, i32
  }
}

</mosaic_0001>

<llo_original>
// kernel: tpu_custom_call.1
$region0: #{tpu_custom_call.1}
  #allocation0 [shape = 'u32[]', space=smem, size = 0x4, offset = 0x4, fixed_abs, tag = 'smem constant byte address 0x4 - core index']
  #allocation1 [shape = 'u32[144,128]{1,0:T(1,128)}', space=vmem, size = 0x12000, scoped, tag = 'internal scratch']
  %s0 = inlined_call_operand.hbm [shape: f32[2,1024], index: 0, kind: input, shape index: {}]
  %s1 = inlined_call_operand.hbm [shape: f32[2,1024], index: 1, kind: output, shape index: {}]
  %s2 = sld [smem:[#allocation0]]
  $region18: #{tpu_custom_call.1} parent=0
    _
  %s4 = ssub.s32 1, %s2
  %s5 = scalar_select 0, %s4, %s2
  $region1: #{tpu_custom_call.1} parent=0
    #allocation2 [shape = 'u8[8192]{0}', space=vmem, size = 0x2000, scoped, tag = 'input window, operand 0, single buffered']
    #allocation3 [shape = 's32[1]{0}', space=sflag, size = 0x4, scoped, tag = 'scoped memory for tpu_custom_call.1']
    #allocation4 [shape = 's32[1]{0}', space=sflag, size = 0x4, scoped, tag = 'scoped memory for tpu_custom_call.1']
    #allocation5 [shape = 'u8[8192]{0}', space=vmem, size = 0x2000, scoped, tag = 'output window, operand 0, single buffered']
    %6 = vsyncpa [#allocation3], 0
    %7 = vsyncpa [#allocation4], 0
    // Predicated region
    $region2: #{tpu_custom_call.1} parent=1 // pred_check
      _
    $region3: #{tpu_custom_call.1} parent=1 // pred_check_branch
      %9 = sbr.rel (0) target = $region5
    $region4: #{tpu_custom_call.1} parent=1 // pred_region
      %s11 = ssub.s32 256, 256
      %12 = vsyncadd [#allocation3], %s11
      %s14 = sshll.u32 [#allocation2], 4
      %s15 = int_to_ptr.vmem [resolvable:$true] %s14
      %17 = dma.hbm_to_vmem [thread:$0]  %s0, 256, %s15, [#allocation3]
    $region5: #{tpu_custom_call.1} parent=1 // pred_fallthru
      _
    // Predicated region
    $region6: #{tpu_custom_call.1} parent=1 // pred_check
      _
    $region7: #{tpu_custom_call.1} parent=1 // pred_check_branch
      %19 = sbr.rel (0) target = $region9
    $region8: #{tpu_custom_call.1} parent=1 // pred_region
      %20 = dma.done [#allocation3], 256
    $region9: #{tpu_custom_call.1} parent=1 // pred_fallthru
      _
    %v21 = vld [vmem:[#allocation2] sm:$0xff]
    %v22 = vld [vmem:[#allocation2 + $0x8] sm:$0xff]
    %v23 = vmul.f32 %v21, 1.442695
    %v24 = vpow.pop %v23
    %v25 = vmul.f32 %v22, 1.442695
    %v26 = vpow.pop %v25
    %v27 = vtanh.pop %v24
    %v28 = vtanh.pop %v26
    %v29 = vmul.f32 %v21, %v27
    %v30 = vmul.f32 %v22, %v28
    %31 = vst [vmem:[#allocation5] sm:$0xff] %v29
    %32 = vst [vmem:[#allocation5 + $0x8] sm:$0xff] %v30
    // Predicated region
    $region10: #{tpu_custom_call.1} parent=1 // pred_check
      _
    $region11: #{tpu_custom_call.1} parent=1 // pred_check_branch
      %34 = sbr.rel (0) target = $region13
    $region12: #{tpu_custom_call.1} parent=1 // pred_region
      %s36 = ssub.s32 256, 256
      %37 = vsyncadd [#allocation4], %s36
      %s39 = sshll.u32 [#allocation5], 4
      %s40 = int_to_ptr.vmem [resolvable:$true] %s39
      %42 = dma.vmem_to_hbm [thread:$0]  %s40, 256, %s1, [#allocation4]
    $region13: #{tpu_custom_call.1} parent=1 // pred_fallthru
      _
    // Predicated region
    $region14: #{tpu_custom_call.1} parent=1 // pred_check
      _
    $region15: #{tpu_custom_call.1} parent=1 // pred_check_branch
      %44 = sbr.rel (0) target = $region17
    $region16: #{tpu_custom_call.1} parent=1 // pred_region
      %45 = dma.done [#allocation4], 256
    $region17: #{tpu_custom_call.1} parent=1 // pred_fallthru
      _
    %46 = vsyncpa [#allocation3], 1
    %47 = vsyncpa [#allocation4], 1

</llo_original>
